<compile_context>
chip_gen: v7x
topology: tpu7x:2x2x1
jax: 0.10.0
libtpu: 0.0.40
codegen_flags: <defaults>
</compile_context>

<pallas_src>
import functools

import jax
import jax.numpy as jnp
from jax.experimental import pallas as pl
from jax.experimental.pallas import tpu as pltpu


_INV_SQRT2 = 0.7071067811865476


def _gelu_exact(x):
    # Matches torch.nn.GELU() default (erf-based, not tanh approximation).
    return 0.5 * x * (1.0 + jax.lax.erf(x * _INV_SQRT2))


def _round_up(n, m):
    return (n + m - 1) // m * m


def _round_down(n, m):
    return n // m * m


def ffn_kernel(x_ref, w1_ref, b1_ref, w2_ref, b2_ref, o_ref, *, approximate_gelu):
    x = x_ref[...]                               # (C, TS) in input dtype
    w1 = w1_ref[...]                             # (C2, C), resident across grid
    w2 = w2_ref[...]                             # (C, C2), resident across grid
    b1 = b1_ref[...].astype(jnp.float32)         # (C2, 1) lane-broadcast
    b2 = b2_ref[...].astype(jnp.float32)         # (C, 1)  lane-broadcast

    # conv1 (1x1): (C2, C) @ (C, TS) -> (C2, TS); f32 accumulation on the MXU.
    h = jnp.dot(w1, x, preferred_element_type=jnp.float32) + b1
    if approximate_gelu:
        # tanh form: transcendental runs in the EUP slot (frees VALU on v6e/v7x).
        # NOTE: slightly different numerics from torch.nn.GELU() default.
        h = jax.nn.gelu(h, approximate=True)
    else:
        h = _gelu_exact(h)                       # exact erf GELU == torch default

    # conv2 (1x1): (C, C2) @ (C2, TS) -> (C, TS). Cast h back to the weight
    # dtype so bf16 weights use the native bf16 MXU path (no-op for f32).
    y = jnp.dot(w2, h.astype(w2.dtype), preferred_element_type=jnp.float32)
    o_ref[...] = (y + b2 + x.astype(jnp.float32)).astype(o_ref.dtype)


@functools.partial(jax.jit, static_argnames=("approximate_gelu",))
def ffn_pallas(x_nchw, w1, b1, w2, b2, *, approximate_gelu=False):
    """FFN(x) = Conv1x1(GELU(Conv1x1(x))) + x, NCHW in / NCHW out.

    x_nchw: (B, C, H, W). w1: (2C, C), b1: (2C,), w2: (C, 2C), b2: (C,)
    (PyTorch Conv2d (out, in) weight layout with the trailing 1x1 dims squeezed).
    """
    B, C, H, W = x_nchw.shape
    C2 = w1.shape[0]
    assert w1.shape == (C2, C) and w2.shape == (C, C2)
    assert b1.shape == (C2,) and b2.shape == (C,)

    S = H * W
    x3d = x_nchw.reshape(B, C, S)                # free reshape, keeps NCHW layout
    itemsize = jnp.dtype(x_nchw.dtype).itemsize

    # ---- VMEM plan (generation aware) ------------------------------------
    try:
        vmem_cap = int(pltpu.get_tpu_info().vmem_capacity_bytes)
    except Exception:                            # conservative fallback
        vmem_cap = 64 * 1024 * 1024
    vmem_cap = max(vmem_cap, 64 * 1024 * 1024)
    # ~40 MiB working-set plan on v7x (64 MiB physical), ~80 MiB on v5e/v6e.
    vmem_budget = min((vmem_cap * 5) // 8, 80 * 1024 * 1024)
    # Raise the scoped-VMEM limit to cover the plan (defaults: 16 MiB on v5e,
    # 32 MiB on v6e/v7x) while leaving headroom for compiler-internal scratch.
    vmem_limit = int(min(vmem_budget + (16 << 20), vmem_cap - (16 << 20)))

    # Per-column VMEM cost: double-buffered input + output tiles plus the f32
    # temporaries (h / GELU, y, residual) the body keeps live.
    bytes_per_col = 2 * 2 * C * itemsize + (2 * C2 + 2 * C) * 4
    max_tile = max(128, _round_down(vmem_budget // bytes_per_col, 128))

    # ---- Spatial (lane) tile ----------------------------------------------
    # As large as VMEM allows: the ~0.35us per-grid-step overhead dominates for
    # small tiles, so fewer / bigger steps is the main lever for this mem-bound op.
    if S < 128:
        tile = S                                 # single full-extent lane block
    else:
        tile_cap = min(max_tile, _round_down(S, 128))   # lane-aligned, <= S
        tile = tile_cap
        if B == 1:
            # Keep >= 2 parallel grid steps so both v7x TensorCores get work
            # (costs one extra, cheap step on single-TC v5e/v6e).
            tile = min(tile, max(128, _round_up(pl.cdiv(S, 2), 128)), tile_cap)
        n_s = pl.cdiv(S, tile)
        # Re-balance columns over the chosen step count so the ragged last tile
        # wastes < 128 dead columns (no host-side pad / slice needed).
        tile = min(_round_up(pl.cdiv(S, n_s), 128), tile_cap)
        # Prefer 512-column multiples so result tiles of the 256-wide v6e/v7x
        # MXU stay full; never adds grid steps, skipped if it would exceed VMEM.
        if tile >= 512:
            tile512 = _round_up(tile, 512)
            if tile512 <= tile_cap:
                tile = tile512
    n_s = pl.cdiv(S, tile)

    b1_2d = b1.reshape(C2, 1)
    b2_2d = b2.reshape(C, 1)

    kernel = functools.partial(ffn_kernel, approximate_gelu=approximate_gelu)
    out3d = pl.pallas_call(
        kernel,
        out_shape=jax.ShapeDtypeStruct((B, C, S), x_nchw.dtype),
        grid_spec=pltpu.PrefetchScalarGridSpec(
            num_scalar_prefetch=0,
            grid=(B, n_s),
            in_specs=[
                # Batch dim squeezed away: kernel sees dense (C, tile) refs.
                pl.BlockSpec((pl.Squeezed(), C, tile), lambda b, s: (b, 0, s)),
                # Weights / biases: constant index map -> stay resident in VMEM.
                pl.BlockSpec((C2, C), lambda b, s: (0, 0)),
                pl.BlockSpec((C2, 1), lambda b, s: (0, 0)),
                pl.BlockSpec((C, C2), lambda b, s: (0, 0)),
                pl.BlockSpec((C, 1), lambda b, s: (0, 0)),
            ],
            out_specs=pl.BlockSpec((pl.Squeezed(), C, tile), lambda b, s: (b, 0, s)),
        ),
        compiler_params=pltpu.CompilerParams(
            # Both grid axes are independent -> shard across v7x's 2 TensorCores
            # (no-op on single-TC v5e/v6e).
            dimension_semantics=("parallel", "parallel"),
            vmem_limit_bytes=vmem_limit,
        ),
    )(x3d, w1, b1_2d, w2, b2_2d)

    return out3d.reshape(B, C, H, W)


def ffn_ref(x_nchw, w1, b1, w2, b2):
    """Pure-JAX reference matching the PyTorch FFN forward (NCHW)."""
    xf = x_nchw.astype(jnp.float32)
    h = jnp.einsum("oc,bchw->bohw", w1.astype(jnp.float32), xf) \
        + b1.astype(jnp.float32).reshape(1, -1, 1, 1)
    h = _gelu_exact(h)
    y = jnp.einsum("co,bohw->bchw", w2.astype(jnp.float32), h) \
        + b2.astype(jnp.float32).reshape(1, -1, 1, 1)
    return (y + xf).astype(x_nchw.dtype)


if __name__ == "__main__":
    key = jax.random.PRNGKey(0)
    B, N, H, W = 2, 4, 16, 16  # small shapes; matches Conv2d(N, 2N, 1) with N=4

    k_x, k_w1, k_b1, k_w2, k_b2, k_x2 = jax.random.split(key, 6)
    x = jax.random.normal(k_x, (B, N, H, W), dtype=jnp.float32)

    # Synthetic parameters in PyTorch Conv2d layout (out, in) with 1x1 squeezed.
    w1 = jax.random.normal(k_w1, (2 * N, N), dtype=jnp.float32) * 0.1
    b1 = jax.random.normal(k_b1, (2 * N,), dtype=jnp.float32) * 0.1
    w2 = jax.random.normal(k_w2, (N, 2 * N), dtype=jnp.float32) * 0.1
    b2 = jax.random.normal(k_b2, (N,), dtype=jnp.float32) * 0.1

    out = jax.block_until_ready(ffn_pallas(x, w1, b1, w2, b2))
    ref = ffn_ref(x, w1, b1, w2, b2)
    assert out.shape == (B, N, H, W)
    assert jnp.allclose(out, ref, atol=1e-5, rtol=1e-5), "mismatch vs reference"

    # Non-128-divisible spatial size exercises the in-pipeline ragged-edge path
    # (no host-side pad / slice anymore).
    x_odd = jax.random.normal(k_x2, (B, N, 10, 13), dtype=jnp.float32)
    out_odd = jax.block_until_ready(ffn_pallas(x_odd, w1, b1, w2, b2))
    ref_odd = ffn_ref(x_odd, w1, b1, w2, b2)
    assert out_odd.shape == (B, N, 10, 13)
    assert jnp.allclose(out_odd, ref_odd, atol=1e-5, rtol=1e-5), "mismatch (ragged tile)"

    print("KERNEL_OK")
</pallas_src>

<mosaic_0001>
module attributes {stable_mosaic.version = 11 : i64} {
  func.func @ffn_kernel(%arg0: i32, %arg1: i32, %arg2: memref<1x4x256xf32, #tpu.memory_space<vmem>>, %arg3: memref<8x4xf32, #tpu.memory_space<vmem>>, %arg4: memref<8x1xf32, #tpu.memory_space<vmem>>, %arg5: memref<4x8xf32, #tpu.memory_space<vmem>>, %arg6: memref<4x1xf32, #tpu.memory_space<vmem>>, %arg7: memref<1x4x256xf32, #tpu.memory_space<vmem>>) attributes {dimension_semantics = [#tpu.dimension_semantics<parallel>, #tpu.dimension_semantics<parallel>], iteration_bounds = array<i64: 2, 1>, scalar_prefetch = 0 : i64, scratch_operands = 0 : i64, tpu.core_type = #tpu.core_type<tc>, window_params = [{transform_indices = @transform_0, window_bounds = array<i64: 1, 4, 256>}, {pipeline_mode = #tpu.pipeline_mode<synchronous>, transform_indices = @transform_1, window_bounds = array<i64: 8, 4>}, {pipeline_mode = #tpu.pipeline_mode<synchronous>, transform_indices = @transform_2, window_bounds = array<i64: 8, 1>}, {pipeline_mode = #tpu.pipeline_mode<synchronous>, transform_indices = @transform_3, window_bounds = array<i64: 4, 8>}, {pipeline_mode = #tpu.pipeline_mode<synchronous>, transform_indices = @transform_4, window_bounds = array<i64: 4, 1>}, {transform_indices = @transform_5, window_bounds = array<i64: 1, 4, 256>}]} {
    %c0 = arith.constant 0 : index
    %c0_0 = arith.constant 0 : index
    %c0_1 = arith.constant 0 : index
    %0 = vector.load %arg2[%c0, %c0_0, %c0_1] : memref<1x4x256xf32, #tpu.memory_space<vmem>>, vector<1x4x256xf32>
    %1 = vector.shape_cast %0 : vector<1x4x256xf32> to vector<4x256xf32>
    %c0_2 = arith.constant 0 : index
    %c0_3 = arith.constant 0 : index
    %2 = vector.load %arg3[%c0_2, %c0_3] : memref<8x4xf32, #tpu.memory_space<vmem>>, vector<8x4xf32>
    %c0_4 = arith.constant 0 : index
    %c0_5 = arith.constant 0 : index
    %3 = vector.load %arg5[%c0_4, %c0_5] : memref<4x8xf32, #tpu.memory_space<vmem>>, vector<4x8xf32>
    %c0_6 = arith.constant 0 : index
    %c0_7 = arith.constant 0 : index
    %4 = vector.load %arg4[%c0_6, %c0_7] : memref<8x1xf32, #tpu.memory_space<vmem>>, vector<8x1xf32>
    %c0_8 = arith.constant 0 : index
    %c0_9 = arith.constant 0 : index
    %5 = vector.load %arg6[%c0_8, %c0_9] : memref<4x1xf32, #tpu.memory_space<vmem>>, vector<4x1xf32>
    %cst = arith.constant dense<0.000000e+00> : vector<8x256xf32>
    %6 = tpu.matmul %2, %1, %cst {dimension_numbers = #tpu.dot_dimension_numbers<[1], [0], [0], [1], [0, 0, 1, 1], [], []>} : vector<8x4xf32>, vector<4x256xf32>, vector<8x256xf32> -> vector<8x256xf32>
    %7 = vector.broadcast %4 : vector<8x1xf32> to vector<8x256xf32>
    %8 = arith.addf %6, %7 : vector<8x256xf32>
    %cst_10 = arith.constant 5.000000e-01 : f32
    %9 = vector.broadcast %cst_10 : f32 to vector<8x256xf32>
    %10 = arith.mulf %9, %8 : vector<8x256xf32>
    %cst_11 = arith.constant 0.707106769 : f32
    %11 = vector.broadcast %cst_11 : f32 to vector<8x256xf32>
    %12 = arith.mulf %8, %11 : vector<8x256xf32>
    %13 = math.erf %12 : vector<8x256xf32>
    %cst_12 = arith.constant 1.000000e+00 : f32
    %14 = vector.broadcast %cst_12 : f32 to vector<8x256xf32>
    %15 = arith.addf %14, %13 : vector<8x256xf32>
    %16 = arith.mulf %10, %15 : vector<8x256xf32>
    %cst_13 = arith.constant dense<0.000000e+00> : vector<4x256xf32>
    %17 = tpu.matmul %3, %16, %cst_13 {dimension_numbers = #tpu.dot_dimension_numbers<[1], [0], [0], [1], [0, 0, 1, 1], [], []>} : vector<4x8xf32>, vector<8x256xf32>, vector<4x256xf32> -> vector<4x256xf32>
    %18 = vector.broadcast %5 : vector<4x1xf32> to vector<4x256xf32>
    %19 = arith.addf %17, %18 : vector<4x256xf32>
    %20 = arith.addf %19, %1 : vector<4x256xf32>
    %c0_14 = arith.constant 0 : index
    %c0_15 = arith.constant 0 : index
    %c0_16 = arith.constant 0 : index
    %21 = vector.load %arg7[%c0_14, %c0_15, %c0_16] : memref<1x4x256xf32, #tpu.memory_space<vmem>>, vector<1x4x256xf32>
    %22 = vector.shape_cast %21 : vector<1x4x256xf32> to vector<4x256xf32>
    %23 = vector.shape_cast %20 : vector<4x256xf32> to vector<1x4x256xf32>
    tpu.vector_store %arg7[%c0_14, %c0_15, %c0_16], %23 {strides = array<i32>} : memref<1x4x256xf32, #tpu.memory_space<vmem>>, vector<1x4x256xf32>,
    return
  }
  func.func @transform_0(%arg0: i32, %arg1: i32) -> (i32, i32, i32) {
    %c0_i32 = arith.constant 0 : i32
    %c0_i32_0 = arith.constant 0 : i32
    return %arg0, %c0_i32, %arg1 : i32, i32, i32
  }
  func.func @transform_1(%arg0: i32, %arg1: i32) -> (i32, i32) {
    %c0_i32 = arith.constant 0 : i32
    %c0_i32_0 = arith.constant 0 : i32
    %c0_i32_1 = arith.constant 0 : i32
    return %c0_i32, %c0_i32_0 : i32, i32
  }
  func.func @transform_2(%arg0: i32, %arg1: i32) -> (i32, i32) {
    %c0_i32 = arith.constant 0 : i32
    %c0_i32_0 = arith.constant 0 : i32
    %c0_i32_1 = arith.constant 0 : i32
    return %c0_i32, %c0_i32_0 : i32, i32
  }
  func.func @transform_3(%arg0: i32, %arg1: i32) -> (i32, i32) {
    %c0_i32 = arith.constant 0 : i32
    %c0_i32_0 = arith.constant 0 : i32
    %c0_i32_1 = arith.constant 0 : i32
    return %c0_i32, %c0_i32_0 : i32, i32
  }
  func.func @transform_4(%arg0: i32, %arg1: i32) -> (i32, i32) {
    %c0_i32 = arith.constant 0 : i32
    %c0_i32_0 = arith.constant 0 : i32
    %c0_i32_1 = arith.constant 0 : i32
    return %c0_i32, %c0_i32_0 : i32, i32
  }
  func.func @transform_5(%arg0: i32, %arg1: i32) -> (i32, i32, i32) {
    %c0_i32 = arith.constant 0 : i32
    %c0_i32_0 = arith.constant 0 : i32
    return %arg0, %c0_i32, %arg1 : i32, i32, i32
  }
}

</mosaic_0001>

<llo_original>
// kernel: ffn_pallas.1
$region0: #{ffn_pallas.1}
  #allocation0 [shape = 'u32[]', space=smem, size = 0x4, offset = 0x4, fixed_abs, tag = 'smem constant byte address 0x4 - core index']
  #allocation1 [shape = 'u32[144,128]{1,0:T(1,128)}', space=vmem, size = 0x12000, scoped, tag = 'internal scratch']
  %s0 = inlined_call_operand.vmem [shape: f32[2,4,256], index: 0, kind: input, shape index: {}]
  %s1 = inlined_call_operand.vmem [shape: f32[8,4], index: 1, kind: input, shape index: {}]
  %s2 = inlined_call_operand.vmem [shape: f32[8,1], index: 2, kind: input, shape index: {}]
  %s3 = inlined_call_operand.vmem [shape: f32[4,8], index: 3, kind: input, shape index: {}]
  %s4 = inlined_call_operand.vmem [shape: f32[4,1], index: 4, kind: input, shape index: {}]
  %s5 = inlined_call_operand.vmem [shape: f32[2,4,256], index: 5, kind: output, shape index: {}]
  %s6 = sld [smem:[#allocation0]]
  $region53: #{ffn_pallas.1} parent=0
    _
  %s8 = ssub.s32 1, %s6
  %s9 = scalar_select 0, %s8, %s6
  loop: start=0, step=1, limit=4
  $region2: #{ffn_pallas.1} parent=0 // loop_pre_header
    _
  $region3: #{ffn_pallas.1} parent=0 // loop_header
    %s11 = sphi 0, %s15
    %p12 = scmp.ge.s32.totalorder %s11, 4
    %s18 = sphi 0, %s30
    %s19 = sphi 0, %s26
    %s20 = sphi 0, %s18
    %s21 = sphi 0, %s19
    %s22 = sphi 0, %s20
    %s23 = sphi 0, %s21
    %s35 = sphi 0, %s37
    %s38 = sphi 0, %s35
    %s39 = sphi 0, %s38
    %s55 = sphi 0, %s39
    %s59 = sphi 0, %s59
    %s61 = sphi 0, %s59
    %s62 = sphi 0, %s61
    %s76 = sphi 0, %s62
    %s80 = sphi 0, %s80
    %s82 = sphi 0, %s80
    %s83 = sphi 0, %s82
    %s97 = sphi 0, %s83
    %s101 = sphi 0, %s101
    %s103 = sphi 0, %s101
    %s104 = sphi 0, %s103
    %s118 = sphi 0, %s104
    %s122 = sphi 0, %s122
    %s124 = sphi 0, %s122
    %s125 = sphi 0, %s124
    %s139 = sphi 0, %s125
    %s147 = sphi 0, %s149
    %s150 = sphi 0, %s147
    %s151 = sphi 0, %s150
    %s167 = sphi 0, %s151
  $region4: #{ffn_pallas.1} parent=0 // loop_header_branch
    %14 = sbr.rel (%p12) target = $region8
  $region5: #{ffn_pallas.1} parent=0 // loop_body
    %s16 = ssub.s32 %s11, 1
    %s17 = ssub.s32 %s11, 2
    %s24 = sadd.s32 1, %s19
    %p25 = scmp.ge.s32.totalorder %s24, 1
    %s26 = scalar_select %p25, 0, %s24
    %s27 = sadd.s32 1, %s18
    %s28 = scalar_select %p25, %s27, %s18
    %p29 = scmp.ge.s32.totalorder %s28, 2
    %s30 = scalar_select %p29, 0, %s28
    %s31 = ssub.s32 %s18, %s30
    %s32 = ssub.s32 %s19, %s26
    %s33 = sor.u32 %s31, %s32
    %p34 = scmp.eq.s32.totalorder %s33, 0
    %s36 = sadd.s32 %s35, 1
    %s37 = scalar_select %p34, %s35, %s36
    %p40 = pneg %p34
    %p41 = scmp.eq.s32.totalorder %s11, 1
    %p42 = por %p40, %p41
    %p43 = scmp.ne.s32.totalorder %s35, %s38
    %p44 = scmp.eq.s32.totalorder %s11, 0
    %p45 = por %p43, %p44
    %p46 = scmp.ne.s32.totalorder %s35, %s38
    %p47 = scmp.eq.s32.totalorder %s16, 1
    %p48 = por %p46, %p47
    %p49 = scmp.ne.s32.totalorder %s38, %s39
    %p50 = scmp.eq.s32.totalorder %s16, 0
    %p51 = por %p49, %p50
    %p52 = scmp.ne.s32.totalorder %s38, %s39
    %p53 = scmp.eq.s32.totalorder %s17, 1
    %p54 = por %p52, %p53
    %p56 = scmp.ne.s32.totalorder %s39, %s55
    %p57 = scmp.eq.s32.totalorder %s17, 0
    %p58 = por %p56, %p57
    %s60 = sadd.s32 %s59, 1
    %p63 = scmp.eq.s32.totalorder %s11, 1
    %p64 = scmp.ne.s32.totalorder %s59, %s61
    %p65 = scmp.eq.s32.totalorder %s11, 0
    %p66 = por %p64, %p65
    %p67 = scmp.ne.s32.totalorder %s59, %s61
    %p68 = scmp.eq.s32.totalorder %s16, 1
    %p69 = por %p67, %p68
    %p70 = scmp.ne.s32.totalorder %s61, %s62
    %p71 = scmp.eq.s32.totalorder %s16, 0
    %p72 = por %p70, %p71
    %p73 = scmp.ne.s32.totalorder %s61, %s62
    %p74 = scmp.eq.s32.totalorder %s17, 1
    %p75 = por %p73, %p74
    %p77 = scmp.ne.s32.totalorder %s62, %s76
    %p78 = scmp.eq.s32.totalorder %s17, 0
    %p79 = por %p77, %p78
    %s81 = sadd.s32 %s80, 1
    %p84 = scmp.eq.s32.totalorder %s11, 1
    %p85 = scmp.ne.s32.totalorder %s80, %s82
    %p86 = scmp.eq.s32.totalorder %s11, 0
    %p87 = por %p85, %p86
    %p88 = scmp.ne.s32.totalorder %s80, %s82
    %p89 = scmp.eq.s32.totalorder %s16, 1
    %p90 = por %p88, %p89
    %p91 = scmp.ne.s32.totalorder %s82, %s83
    %p92 = scmp.eq.s32.totalorder %s16, 0
    %p93 = por %p91, %p92
    %p94 = scmp.ne.s32.totalorder %s82, %s83
    %p95 = scmp.eq.s32.totalorder %s17, 1
    %p96 = por %p94, %p95
    %p98 = scmp.ne.s32.totalorder %s83, %s97
    %p99 = scmp.eq.s32.totalorder %s17, 0
    %p100 = por %p98, %p99
    %s102 = sadd.s32 %s101, 1
    %p105 = scmp.eq.s32.totalorder %s11, 1
    %p106 = scmp.ne.s32.totalorder %s101, %s103
    %p107 = scmp.eq.s32.totalorder %s11, 0
    %p108 = por %p106, %p107
    %p109 = scmp.ne.s32.totalorder %s101, %s103
    %p110 = scmp.eq.s32.totalorder %s16, 1
    %p111 = por %p109, %p110
    %p112 = scmp.ne.s32.totalorder %s103, %s104
    %p113 = scmp.eq.s32.totalorder %s16, 0
    %p114 = por %p112, %p113
    %p115 = scmp.ne.s32.totalorder %s103, %s104
    %p116 = scmp.eq.s32.totalorder %s17, 1
    %p117 = por %p115, %p116
    %p119 = scmp.ne.s32.totalorder %s104, %s118
    %p120 = scmp.eq.s32.totalorder %s17, 0
    %p121 = por %p119, %p120
    %s123 = sadd.s32 %s122, 1
    %p126 = scmp.eq.s32.totalorder %s11, 1
    %p127 = scmp.ne.s32.totalorder %s122, %s124
    %p128 = scmp.eq.s32.totalorder %s11, 0
    %p129 = por %p127, %p128
    %p130 = scmp.ne.s32.totalorder %s122, %s124
    %p131 = scmp.eq.s32.totalorder %s16, 1
    %p132 = por %p130, %p131
    %p133 = scmp.ne.s32.totalorder %s124, %s125
    %p134 = scmp.eq.s32.totalorder %s16, 0
    %p135 = por %p133, %p134
    %p136 = scmp.ne.s32.totalorder %s124, %s125
    %p137 = scmp.eq.s32.totalorder %s17, 1
    %p138 = por %p136, %p137
    %p140 = scmp.ne.s32.totalorder %s125, %s139
    %p141 = scmp.eq.s32.totalorder %s17, 0
    %p142 = por %p140, %p141
    %s143 = ssub.s32 %s18, %s30
    %s144 = ssub.s32 %s19, %s26
    %s145 = sor.u32 %s143, %s144
    %p146 = scmp.eq.s32.totalorder %s145, 0
    %s148 = sadd.s32 %s147, 1
    %s149 = scalar_select %p146, %s147, %s148
    %p152 = pneg %p146
    %p153 = scmp.eq.s32.totalorder %s11, 1
    %p154 = por %p152, %p153
    %p155 = scmp.ne.s32.totalorder %s147, %s150
    %p156 = scmp.eq.s32.totalorder %s11, 0
    %p157 = por %p155, %p156
    %p158 = scmp.ne.s32.totalorder %s147, %s150
    %p159 = scmp.eq.s32.totalorder %s16, 1
    %p160 = por %p158, %p159
    %p161 = scmp.ne.s32.totalorder %s150, %s151
    %p162 = scmp.eq.s32.totalorder %s16, 0
    %p163 = por %p161, %p162
    %p164 = scmp.ne.s32.totalorder %s150, %s151
    %p165 = scmp.eq.s32.totalorder %s17, 1
    %p166 = por %p164, %p165
    %p168 = scmp.ne.s32.totalorder %s151, %s167
    %p169 = scmp.eq.s32.totalorder %s17, 0
    %p170 = por %p168, %p169
    %p171 = scmp.le.s32.totalorder 1, %s11
    %p172 = scmp.lt.s32.totalorder %s11, 3
    %p173 = pnand %p171, %p172
    %p174 = pneg %p173
    // Predicated region
    $region9: #{ffn_pallas.1} parent=5 // pred_check
      _
    $region10: #{ffn_pallas.1} parent=5 // pred_check_branch
      %176 = sbr.rel (%p173) target = $region12
    $region11: #{ffn_pallas.1} parent=5 // pred_region
      %s177 = ssub.s32 %s11, 1
      // Predicated region
      $region13: #{ffn_pallas.1} parent=11 // pred_check
        %p178 = pneg %p72
      $region14: #{ffn_pallas.1} parent=11 // pred_check_branch
        %180 = sbr.rel (%p178) target = $region16
      $region15: #{ffn_pallas.1} parent=11 // pred_region
        _
      $region16: #{ffn_pallas.1} parent=11 // pred_fallthru
        _
      // Predicated region
      $region17: #{ffn_pallas.1} parent=11 // pred_check
        %p181 = pneg %p93
      $region18: #{ffn_pallas.1} parent=11 // pred_check_branch
        %183 = sbr.rel (%p181) target = $region20
      $region19: #{ffn_pallas.1} parent=11 // pred_region
        _
      $region20: #{ffn_pallas.1} parent=11 // pred_fallthru
        _
      // Predicated region
      $region21: #{ffn_pallas.1} parent=11 // pred_check
        %p184 = pneg %p114
      $region22: #{ffn_pallas.1} parent=11 // pred_check_branch
        %186 = sbr.rel (%p184) target = $region24
      $region23: #{ffn_pallas.1} parent=11 // pred_region
        _
      $region24: #{ffn_pallas.1} parent=11 // pred_fallthru
        _
      // Predicated region
      $region25: #{ffn_pallas.1} parent=11 // pred_check
        %p187 = pneg %p135
      $region26: #{ffn_pallas.1} parent=11 // pred_check_branch
        %189 = sbr.rel (%p187) target = $region28
      $region27: #{ffn_pallas.1} parent=11 // pred_region
        _
      $region28: #{ffn_pallas.1} parent=11 // pred_fallthru
        _
    $region12: #{ffn_pallas.1} parent=5 // pred_fallthru
      _
    %p190 = scmp.lt.s32.totalorder %s11, 2
    // Predicated region
    $region29: #{ffn_pallas.1} parent=5 // pred_check
      %p191 = pneg %p190
    $region30: #{ffn_pallas.1} parent=5 // pred_check_branch
      %193 = sbr.rel (%p191) target = $region32
    $region31: #{ffn_pallas.1} parent=5 // pred_region
      // Predicated region
      $region33: #{ffn_pallas.1} parent=31 // pred_check
        %p194 = pneg %p45
      $region34: #{ffn_pallas.1} parent=31 // pred_check_branch
        %196 = sbr.rel (%p194) target = $region36
      $region35: #{ffn_pallas.1} parent=31 // pred_region
        %s197 = smul.u32 2, %s19
        %p198 = scmp.lt.s32.totalorder %s18, 1
        %s199 = scalar_select %p198, %s18, 1
        %p200 = scmp.lt.s32.totalorder %s197, 1
        %s201 = scalar_select %p200, %s197, 1
        %s202 = smul.addr %s199, 2
        %s203 = sadd.s32 %s201, %s202
        %s204 = smul.addr %s203, 4
        %s205 = scalar_lea.vmem %s0, %s204
        %s206 = smul.u32 2, %s19
      $region36: #{ffn_pallas.1} parent=31 // pred_fallthru
        _
    $region32: #{ffn_pallas.1} parent=5 // pred_fallthru
      _
    %p207 = scmp.le.s32.totalorder 1, %s11
    %p208 = scmp.lt.s32.totalorder %s11, 3
    %p209 = pnand %p207, %p208
    %p210 = pneg %p209
    // Predicated region
    $region37: #{ffn_pallas.1} parent=5 // pred_check
      _
    $region38: #{ffn_pallas.1} parent=5 // pred_check_branch
      %212 = sbr.rel (%p209) target = $region40
    $region39: #{ffn_pallas.1} parent=5 // pred_region
      %s213 = ssub.s32 %s11, 1
      %s214 = smul.u32 2, %s21
      %p215 = scmp.lt.s32.totalorder %s20, 1
      %s216 = scalar_select %p215, %s20, 1
      %p217 = scmp.lt.s32.totalorder %s214, 1
      %s218 = scalar_select %p217, %s214, 1
      %s219 = smul.addr %s216, 2
      %s220 = sadd.s32 %s218, %s219
      %s221 = smul.addr %s220, 4
      %s222 = scalar_lea.vmem %s0, %s221
      %p223 = pneg %p51
      %p224 = pneg %p48
      %p225 = pneg %p72
      %p226 = pneg %p69
      %p227 = pneg %p93
      %p228 = pneg %p90
      %p229 = pneg %p114
      %p230 = pneg %p111
      %p231 = pneg %p135
      %p232 = pneg %p132
      %p233 = pneg %p163
      %p234 = pneg %p160
      %s235 = smul.u32 2, %s21
      %p236 = scmp.lt.s32.totalorder %s20, 1
      %s237 = scalar_select %p236, %s20, 1
      %p238 = scmp.lt.s32.totalorder %s235, 1
      %s239 = scalar_select %p238, %s235, 1
      %s240 = smul.addr %s237, 2
      %s241 = sadd.s32 %s239, %s240
      %s242 = smul.addr %s241, 4
      %s243 = scalar_lea.vmem %s5, %s242
      %s244 = smul.u32 2, %s21
      %p245 = scmp.lt.s32.totalorder %s20, 1
      %s246 = scalar_select %p245, %s20, 1
      %p247 = scmp.lt.s32.totalorder %s244, 1
      %s248 = scalar_select %p247, %s244, 1
      %s249 = smul.addr %s246, 2
      %s250 = sadd.s32 %s248, %s249
      %s251 = smul.addr %s250, 4
      %s252 = scalar_lea.vmem %s0, %s251
      %s253 = smul.u32 2, %s21
      %s254 = smul.u32 2, %s21
      %p255 = scmp.lt.s32.totalorder %s20, 1
      %s256 = scalar_select %p255, %s20, 1
      %p257 = scmp.lt.s32.totalorder %s254, 1
      %s258 = scalar_select %p257, %s254, 1
      %s259 = smul.addr %s256, 2
      %s260 = sadd.s32 %s258, %s259
      %s261 = smul.addr %s260, 4
      %s262 = scalar_lea.vmem %s5, %s261
      %s263 = smul.u32 2, %s21
      %v264 = vld [vmem:[%s252] sm:$0xff]
      %v265 = vld [vmem:[%s1] sm:$0xff]
      %v266 = vld [vmem:[%s3] sm:$0xf]
      %v267 = vld [vmem:[%s2] sm:$0xff]
      %v268 = vld [vmem:[%s4] sm:$0xf]
      %270 = vset.pattern.permute.xlu0 0
      %271 = vperm.xlu0 %270, %v267
      %v272 = vpop.permute.xlu0 %271
      %v275 = vcombine.high %v264, %v264
      %vm276 = vcmask 31744
      %v278 = vsel %vm276, %v265, 0
      %vm280 = vcmask 1043456
      %v281 = vsel %vm280, %v264, 0
      %v283 = vsel %vm280, %v275, 0
      %285 = vmatprep.subr.mxu0 %v283
      %286 = vmatpush1.msra.mxu0 %v281
      %287 = vmatprep.subr.mxu0 0.0
      %288 = vmatpush1.msra.mxu0 0.0
      %289 = vmatprep.subr.mxu0 0.0
      %290 = vmatpush1.msra.mxu0 0.0
      %291 = vmatprep.subr.mxu0 0.0
      %292 = vmatpush1.msra.mxu0 0.0
      %293 = vmatprep.subr.mxu0 0.0
      %294 = vmatpush1.msra.mxu0 0.0
      %295 = vmatprep.subr.mxu0 0.0
      %296 = vmatpush1.msra.mxu0 0.0
      %297 = vmatprep.subr.mxu0 0.0
      %298 = vmatpush1.msra.mxu0 0.0
      %299 = vmatprep.subr.mxu0 0.0
      %300 = vmatpush1.msra.mxu0 0.0
      %301 = vmatprep.subr.mxu0 0.0
      %302 = vmatpush1.msra.mxu0 0.0
      %303 = vmatprep.subr.mxu0 0.0
      %304 = vmatpush1.msra.mxu0 0.0
      %305 = vmatprep.subr.mxu0 0.0
      %306 = vmatpush1.msra.mxu0 0.0
      %307 = vmatprep.subr.mxu0 0.0
      %308 = vmatpush1.msra.mxu0 0.0
      %309 = vmatprep.subr.mxu0 0.0
      %310 = vmatpush1.msra.mxu0 0.0
      %311 = vmatprep.subr.mxu0 0.0
      %312 = vmatpush1.msra.mxu0 0.0
      %313 = vmatprep.subr.mxu0 0.0
      %314 = vmatpush1.msra.mxu0 0.0
      %315 = vmatprep.subr.mxu0 0.0
      %316 = vmatpush1.msra.mxu0 0.0
      %317 = vmatprep.subr.mxu0 0.0
      %318 = vmatpush1.msra.mxu0 0.0
      %319 = vmatprep.subr.mxu0 0.0
      %320 = vmatpush1.msra.mxu0 0.0
      %321 = vmatprep.subr.mxu0 0.0
      %322 = vmatpush1.msra.mxu0 0.0
      %323 = vmatprep.subr.mxu0 0.0
      %324 = vmatpush1.msra.mxu0 0.0
      %325 = vmatprep.subr.mxu0 0.0
      %326 = vmatpush1.msra.mxu0 0.0
      %327 = vmatprep.subr.mxu0 0.0
      %328 = vmatpush1.msra.mxu0 0.0
      %329 = vmatprep.subr.mxu0 0.0
      %330 = vmatpush1.msra.mxu0 0.0
      %331 = vmatprep.subr.mxu0 0.0
      %332 = vmatpush1.msra.mxu0 0.0
      %333 = vmatprep.subr.mxu0 0.0
      %334 = vmatpush1.msra.mxu0 0.0
      %335 = vmatprep.subr.mxu0 0.0
      %336 = vmatpush1.msra.mxu0 0.0
      %337 = vmatprep.subr.mxu0 0.0
      %338 = vmatpush1.msra.mxu0 0.0
      %339 = vmatprep.subr.mxu0 0.0
      %340 = vmatpush1.msra.mxu0 0.0
      %341 = vmatprep.subr.mxu0 0.0
      %342 = vmatpush1.msra.mxu0 0.0
      %343 = vmatprep.subr.mxu0 0.0
      %344 = vmatpush1.msra.mxu0 0.0
      %345 = vmatprep.subr.mxu0 0.0
      %346 = vmatpush1.msra.mxu0 0.0
      %347 = vmatprep.subr.mxu0 0.0
      %348 = vmatpush1.msra.mxu0 0.0
      %349 = vmatprep.mubr.f32.mxu0 0.0
      %350 = vmatmul.mubr.f32.gmra.mrb[0].mxu0 %v278
      %v351 = vpop.f32.mrb[0].mxu0
      %v352 = vadd.f32 %v272, %v351
      %v353 = vpop.f32.mrb[0].mxu0
      %v354 = vadd.f32 %v272, %v353
      %355 = vdwg.mxu0
      %v356 = vmul.f32 %v352, 0.5
      %v357 = vmul.f32 %v354, 0.5
      %v358 = vmul.f32 %v352, 0.70710677
      %v359 = vmul.f32 %v354, 0.70710677
      %v360 = verf.f32.pop %v358
      %v361 = verf.f32.pop %v359
      %v362 = vadd.f32 %v360, 1.0
      %v363 = vadd.f32 %v361, 1.0
      %v364 = vmul.f32 %v356, %v362
      %v365 = vmul.f32 %v357, %v363
      %367 = vset.pattern.permute.xlu0 0
      %368 = vperm.xlu0 %367, %v268
      %v369 = vpop.permute.xlu0 %368
      %vm371 = vcmask 64512
      %v373 = vsel %vm371, %v266, 0
      %375 = vmatprep.subr.mxu0 %v365
      %376 = vmatpush1.msra.mxu0 %v364
      %377 = vmatprep.subr.mxu0 0.0
      %378 = vmatpush1.msra.mxu0 0.0
      %379 = vmatprep.subr.mxu0 0.0
      %380 = vmatpush1.msra.mxu0 0.0
      %381 = vmatprep.subr.mxu0 0.0
      %382 = vmatpush1.msra.mxu0 0.0
      %383 = vmatprep.subr.mxu0 0.0
      %384 = vmatpush1.msra.mxu0 0.0
      %385 = vmatprep.subr.mxu0 0.0
      %386 = vmatpush1.msra.mxu0 0.0
      %387 = vmatprep.subr.mxu0 0.0
      %388 = vmatpush1.msra.mxu0 0.0
      %389 = vmatprep.subr.mxu0 0.0
      %390 = vmatpush1.msra.mxu0 0.0
      %391 = vmatprep.subr.mxu0 0.0
      %392 = vmatpush1.msra.mxu0 0.0
      %393 = vmatprep.subr.mxu0 0.0
      %394 = vmatpush1.msra.mxu0 0.0
      %395 = vmatprep.subr.mxu0 0.0
      %396 = vmatpush1.msra.mxu0 0.0
      %397 = vmatprep.subr.mxu0 0.0
      %398 = vmatpush1.msra.mxu0 0.0
      %399 = vmatprep.subr.mxu0 0.0
      %400 = vmatpush1.msra.mxu0 0.0
      %401 = vmatprep.subr.mxu0 0.0
      %402 = vmatpush1.msra.mxu0 0.0
      %403 = vmatprep.subr.mxu0 0.0
      %404 = vmatpush1.msra.mxu0 0.0
      %405 = vmatprep.subr.mxu0 0.0
      %406 = vmatpush1.msra.mxu0 0.0
      %407 = vmatprep.subr.mxu0 0.0
      %408 = vmatpush1.msra.mxu0 0.0
      %409 = vmatprep.subr.mxu0 0.0
      %410 = vmatpush1.msra.mxu0 0.0
      %411 = vmatprep.subr.mxu0 0.0
      %412 = vmatpush1.msra.mxu0 0.0
      %413 = vmatprep.subr.mxu0 0.0
      %414 = vmatpush1.msra.mxu0 0.0
      %415 = vmatprep.subr.mxu0 0.0
      %416 = vmatpush1.msra.mxu0 0.0
      %417 = vmatprep.subr.mxu0 0.0
      %418 = vmatpush1.msra.mxu0 0.0
      %419 = vmatprep.subr.mxu0 0.0
      %420 = vmatpush1.msra.mxu0 0.0
      %421 = vmatprep.subr.mxu0 0.0
      %422 = vmatpush1.msra.mxu0 0.0
      %423 = vmatprep.subr.mxu0 0.0
      %424 = vmatpush1.msra.mxu0 0.0
      %425 = vmatprep.subr.mxu0 0.0
      %426 = vmatpush1.msra.mxu0 0.0
      %427 = vmatprep.subr.mxu0 0.0
      %428 = vmatpush1.msra.mxu0 0.0
      %429 = vmatprep.subr.mxu0 0.0
      %430 = vmatpush1.msra.mxu0 0.0
      %431 = vmatprep.subr.mxu0 0.0
      %432 = vmatpush1.msra.mxu0 0.0
      %433 = vmatprep.subr.mxu0 0.0
      %434 = vmatpush1.msra.mxu0 0.0
      %435 = vmatprep.subr.mxu0 0.0
      %436 = vmatpush1.msra.mxu0 0.0
      %437 = vmatprep.subr.mxu0 0.0
      %438 = vmatpush1.msra.mxu0 0.0
      %439 = vmatprep.mubr.f32.mxu0 0.0
      %440 = vmatmul.mubr.f32.gmra.mrb[0].mxu0 %v373
      %v441 = vpop.f32.mrb[0].mxu0
      %v442 = vadd.f32 %v369, %v441
      %v443 = vpop.f32.mrb[0].mxu0
      %v444 = vadd.f32 %v369, %v443
      %445 = vdwg.mxu0
      %v447 = vadd.f32 %v442, %v264
      %v448 = vadd.f32 %v444, %v275
      %v451 = vcombine.low %v447, %v448
      %453 = vst [vmem:[%s262] sm:$0xff] %v451
      %s454 = smul.u32 2, %s21
      %p455 = scmp.lt.s32.totalorder %s20, 1
      %s456 = scalar_select %p455, %s20, 1
      %p457 = scmp.lt.s32.totalorder %s454, 1
      %s458 = scalar_select %p457, %s454, 1
      %s459 = smul.addr %s456, 2
      %s460 = sadd.s32 %s458, %s459
      %s461 = smul.addr %s460, 4
      %s462 = scalar_lea.vmem %s5, %s461
      // Predicated region
      $region41: #{ffn_pallas.1} parent=39 // pred_check
        %p463 = pneg %p160
      $region42: #{ffn_pallas.1} parent=39 // pred_check_branch
        %465 = sbr.rel (%p463) target = $region44
      $region43: #{ffn_pallas.1} parent=39 // pred_region
        %s466 = smul.u32 2, %s21
      $region44: #{ffn_pallas.1} parent=39 // pred_fallthru
        _
    $region40: #{ffn_pallas.1} parent=5 // pred_fallthru
      _
    %p467 = scmp.le.s32.totalorder 2, %s11
    // Predicated region
    $region45: #{ffn_pallas.1} parent=5 // pred_check
      %p468 = pneg %p467
    $region46: #{ffn_pallas.1} parent=5 // pred_check_branch
      %470 = sbr.rel (%p468) target = $region48
    $region47: #{ffn_pallas.1} parent=5 // pred_region
      %s471 = ssub.s32 %s11, 2
      // Predicated region
      $region49: #{ffn_pallas.1} parent=47 // pred_check
        %p472 = pneg %p166
      $region50: #{ffn_pallas.1} parent=47 // pred_check_branch
        %474 = sbr.rel (%p472) target = $region52
      $region51: #{ffn_pallas.1} parent=47 // pred_region
        %s475 = smul.u32 2, %s23
        %p476 = scmp.lt.s32.totalorder %s22, 1
        %s477 = scalar_select %p476, %s22, 1
        %p478 = scmp.lt.s32.totalorder %s475, 1
        %s479 = scalar_select %p478, %s475, 1
        %s480 = smul.addr %s477, 2
        %s481 = sadd.s32 %s479, %s480
        %s482 = smul.addr %s481, 4
        %s483 = scalar_lea.vmem %s5, %s482
      $region52: #{ffn_pallas.1} parent=47 // pred_fallthru
        _
    $region48: #{ffn_pallas.1} parent=5 // pred_fallthru
      _
  $region6: #{ffn_pallas.1} parent=0 // loop_footer
    %s15 = sadd.s32 1, %s11
  $region7: #{ffn_pallas.1} parent=0 // loop_footer_branch
    %10 = sbr.rel target = $region3
  $region8: #{ffn_pallas.1} parent=0 // loop_exit
    _

</llo_original>
